<compile_context>
chip_gen: v5e
topology: v5e:2x2
jax: 0.10.0
libtpu: 0.0.40
codegen_flags: <defaults>
</compile_context>

<pallas_src>
import functools

import jax
import jax.numpy as jnp
from jax.experimental import pallas as pl
from jax.experimental.pallas import tpu as pltpu


def _distmult_kernel(zs_ref, zd_ref, et_ref, rel_ref, out_ref):
    # zs_ref, zd_ref : (tile_e, H) — node gathers in their natural layout
    # et_ref         : (1, tile_e) int32 edge types for this tile
    # rel_ref        : (R_pad, H)  f32 relation table (zero-padded rows), resident
    # out_ref        : (1, tile_e) f32 lane-dense scores
    zs = zs_ref[...].astype(jnp.float32)
    zd = zd_ref[...].astype(jnp.float32)
    prod = zs * zd                                          # (tile_e, H), VPU

    rel = rel_ref[...]                                      # (R_pad, H)
    # G[r, e] = sum_h rel[r, h] * prod[e, h]  — MXU, K=H contraction, "NT" form.
    g = jax.lax.dot_general(
        rel, prod, (((1,), (1,)), ((), ())),
        preferred_element_type=jnp.float32)                 # (R_pad, tile_e)

    et = et_ref[...]                                        # (1, tile_e)
    onehot = jax.lax.broadcasted_iota(jnp.int32, g.shape, 0) == et  # (R_pad, tile_e)
    # Select the matching relation row per edge; sublane reduce -> lane-dense row.
    out_ref[...] = jnp.sum(jnp.where(onehot, g, 0.0), axis=0,
                           keepdims=True).astype(out_ref.dtype)


@functools.partial(jax.jit, static_argnames=("tile_e", "stream_dtype"))
def distmult_decode(z, edge_index, edge_type, rel_emb, *, tile_e=8192,
                    stream_dtype=None):
    """DistMult scores: sum(z[src] * rel_emb[type] * z[dst], axis=-1) per edge."""
    E = edge_type.shape[0]
    H = z.shape[1]
    R = rel_emb.shape[0]

    if E == 0:                                              # empty-edge guard
        return jnp.zeros((0,), jnp.float32)

    # tile_e: multiple of 128 (lane width), clamped so tiny E isn't over-padded.
    e_ceil = pl.cdiv(E, 128) * 128
    tile_e = max(128, (min(tile_e, e_ceil) // 128) * 128)
    n_tiles = pl.cdiv(E, tile_e)
    e_pad = n_tiles * tile_e
    pad = e_pad - E

    # --- glue: pad the tiny index vectors (NOT the gathered data) -----------
    src = jnp.pad(edge_index[0], (0, pad)).astype(jnp.int32)
    dst = jnp.pad(edge_index[1], (0, pad)).astype(jnp.int32)
    et2 = jnp.pad(edge_type, (0, pad)).astype(jnp.int32).reshape(1, e_pad)

    z_src = jnp.take(z, src, axis=0)                        # (e_pad, H), no transpose
    z_dst = jnp.take(z, dst, axis=0)
    if stream_dtype is not None:                            # optional bf16 streaming
        z_src = z_src.astype(stream_dtype)
        z_dst = z_dst.astype(stream_dtype)

    # Relation table stays f32 (accuracy) and VMEM-resident; pad rows to 8.
    r_pad = max(8, pl.cdiv(R, 8) * 8)
    rel_p = jnp.pad(rel_emb.astype(jnp.float32), ((0, r_pad - R), (0, 0)))

    # --- hot path in Pallas --------------------------------------------------
    node_spec = pl.BlockSpec((tile_e, H), lambda i: (i, 0))
    row_spec = pl.BlockSpec((1, tile_e), lambda i: (0, i))
    tbl_spec = pl.BlockSpec((r_pad, H), lambda i: (0, 0))   # resident, re-used

    out = pl.pallas_call(
        _distmult_kernel,
        out_shape=jax.ShapeDtypeStruct((1, e_pad), jnp.float32),
        grid_spec=pltpu.PrefetchScalarGridSpec(
            num_scalar_prefetch=0,
            grid=(n_tiles,),
            in_specs=[node_spec, node_spec, row_spec, tbl_spec],
            out_specs=row_spec,
        ),
        compiler_params=pltpu.CompilerParams(
            dimension_semantics=("parallel",),
            vmem_limit_bytes=32 * 1024 * 1024),
    )(z_src, z_dst, et2, rel_p)

    return out[0, :E]                                       # (E,) float32


def xavier_uniform(key, shape, dtype=jnp.float32):
    # Matches torch.nn.init.xavier_uniform_ (gain=1): U(-a, a), a=sqrt(6/(fi+fo))
    fan_in, fan_out = shape[1], shape[0]
    a = (6.0 / (fan_in + fan_out)) ** 0.5
    return jax.random.uniform(key, shape, dtype, minval=-a, maxval=a)


if __name__ == "__main__":
    key = jax.random.PRNGKey(0)
    k_z, k_rel, k_src, k_dst, k_type = jax.random.split(key, 5)

    num_nodes = 32
    hidden_channels = 32
    num_relations = 4
    num_edges = 16

    # Deterministic synthetic parameters / inputs (no checkpoint loading).
    # edges_emb from __init__ is unused in forward(); only rel_emb matters.
    rel_emb = xavier_uniform(k_rel, (num_relations, hidden_channels))
    z = jax.random.normal(k_z, (num_nodes, hidden_channels), jnp.float32)
    edge_index = jnp.stack([
        jax.random.randint(k_src, (num_edges,), 0, num_nodes),
        jax.random.randint(k_dst, (num_edges,), 0, num_nodes),
    ])                                                      # (2, E) int32
    edge_type = jax.random.randint(k_type, (num_edges,), 0, num_relations)

    out = distmult_decode(z, edge_index, edge_type, rel_emb)
    out = jax.block_until_ready(out)

    # Reference check (pure JAX) mirroring the PyTorch forward.
    ref = jnp.sum(z[edge_index[0]] * rel_emb[edge_type] * z[edge_index[1]], axis=1)
    assert out.shape == (num_edges,)
    assert jnp.allclose(out, ref, atol=1e-5, rtol=1e-5)

    print("KERNEL_OK")
</pallas_src>

<mosaic_0001>
module attributes {stable_mosaic.version = 11 : i64} {
  func.func @_distmult_kernel(%arg0: i32, %arg1: memref<128x32xf32, #tpu.memory_space<vmem>>, %arg2: memref<128x32xf32, #tpu.memory_space<vmem>>, %arg3: memref<1x128xi32, #tpu.memory_space<vmem>>, %arg4: memref<8x32xf32, #tpu.memory_space<vmem>>, %arg5: memref<1x128xf32, #tpu.memory_space<vmem>>) attributes {dimension_semantics = [#tpu.dimension_semantics<parallel>], iteration_bounds = array<i64: 1>, scalar_prefetch = 0 : i64, scratch_operands = 0 : i64, tpu.core_type = #tpu.core_type<tc>, window_params = [{transform_indices = @transform_0, window_bounds = array<i64: 128, 32>}, {transform_indices = @transform_1, window_bounds = array<i64: 128, 32>}, {transform_indices = @transform_2, window_bounds = array<i64: 1, 128>}, {pipeline_mode = #tpu.pipeline_mode<synchronous>, transform_indices = @transform_3, window_bounds = array<i64: 8, 32>}, {transform_indices = @transform_4, window_bounds = array<i64: 1, 128>}]} {
    %c0 = arith.constant 0 : index
    %c0_0 = arith.constant 0 : index
    %0 = vector.load %arg1[%c0, %c0_0] : memref<128x32xf32, #tpu.memory_space<vmem>>, vector<128x32xf32>
    %c0_1 = arith.constant 0 : index
    %c0_2 = arith.constant 0 : index
    %1 = vector.load %arg2[%c0_1, %c0_2] : memref<128x32xf32, #tpu.memory_space<vmem>>, vector<128x32xf32>
    %2 = arith.mulf %0, %1 : vector<128x32xf32>
    %c0_3 = arith.constant 0 : index
    %c0_4 = arith.constant 0 : index
    %3 = vector.load %arg4[%c0_3, %c0_4] : memref<8x32xf32, #tpu.memory_space<vmem>>, vector<8x32xf32>
    %cst = arith.constant dense<0.000000e+00> : vector<8x128xf32>
    %4 = tpu.matmul %3, %2, %cst {dimension_numbers = #tpu.dot_dimension_numbers<[1], [1], [0], [0], [0, 0, 1, 0], [], []>} : vector<8x32xf32>, vector<128x32xf32>, vector<8x128xf32> -> vector<8x128xf32>
    %c0_5 = arith.constant 0 : index
    %c0_6 = arith.constant 0 : index
    %5 = vector.load %arg3[%c0_5, %c0_6] : memref<1x128xi32, #tpu.memory_space<vmem>>, vector<1x128xi32>
    %6 = tpu.iota {dimensions = array<i32: 0>} : vector<8x128xi32>
    %7 = vector.broadcast %5 : vector<1x128xi32> to vector<8x128xi32>
    %8 = arith.cmpi eq, %6, %7 : vector<8x128xi32>
    %cst_7 = arith.constant 0.000000e+00 : f32
    %9 = vector.broadcast %cst_7 : f32 to vector<8x128xf32>
    %10 = arith.select %8, %4, %9 : vector<8x128xi1>, vector<8x128xf32>
    %cst_8 = arith.constant dense<0.000000e+00> : vector<128xf32>
    %11 = vector.multi_reduction <add>, %10, %cst_8 [0] : vector<8x128xf32> to vector<128xf32>
    %12 = vector.shape_cast %11 : vector<128xf32> to vector<1x128xf32>
    %c0_9 = arith.constant 0 : index
    %c0_10 = arith.constant 0 : index
    %13 = vector.load %arg5[%c0_9, %c0_10] : memref<1x128xf32, #tpu.memory_space<vmem>>, vector<1x128xf32>
    tpu.vector_store %arg5[%c0_9, %c0_10], %12 {strides = array<i32>} : memref<1x128xf32, #tpu.memory_space<vmem>>, vector<1x128xf32>,
    return
  }
  func.func @transform_0(%arg0: i32) -> (i32, i32) {
    %c0_i32 = arith.constant 0 : i32
    %c0_i32_0 = arith.constant 0 : i32
    return %arg0, %c0_i32 : i32, i32
  }
  func.func @transform_1(%arg0: i32) -> (i32, i32) {
    %c0_i32 = arith.constant 0 : i32
    %c0_i32_0 = arith.constant 0 : i32
    return %arg0, %c0_i32 : i32, i32
  }
  func.func @transform_2(%arg0: i32) -> (i32, i32) {
    %c0_i32 = arith.constant 0 : i32
    %c0_i32_0 = arith.constant 0 : i32
    return %c0_i32, %arg0 : i32, i32
  }
  func.func @transform_3(%arg0: i32) -> (i32, i32) {
    %c0_i32 = arith.constant 0 : i32
    %c0_i32_0 = arith.constant 0 : i32
    %c0_i32_1 = arith.constant 0 : i32
    return %c0_i32, %c0_i32_0 : i32, i32
  }
  func.func @transform_4(%arg0: i32) -> (i32, i32) {
    %c0_i32 = arith.constant 0 : i32
    %c0_i32_0 = arith.constant 0 : i32
    return %c0_i32, %arg0 : i32, i32
  }
}

</mosaic_0001>

<llo_original>
// kernel: distmult_decode.1
$region0: #{distmult_decode.1}
  #allocation0 [shape = 'u32[]', space=smem, size = 0x4, offset = 0x4, fixed_abs, tag = 'smem constant byte address 0x4 - core index']
  #allocation1 [shape = 'u32[72,128]{1,0:T(1,128)}', space=vmem, size = 0x9000, scoped, tag = 'internal scratch']
  %s0 = inlined_call_operand.vmem [shape: f32[128,32], index: 0, kind: input, shape index: {}]
  %s1 = inlined_call_operand.vmem [shape: f32[128,32], index: 1, kind: input, shape index: {}]
  %s2 = inlined_call_operand.vmem [shape: s32[1,128], index: 2, kind: input, shape index: {}]
  %s3 = inlined_call_operand.vmem [shape: f32[8,32], index: 3, kind: input, shape index: {}]
  %s4 = inlined_call_operand.vmem [shape: f32[1,128], index: 4, kind: output, shape index: {}]
  %s5 = sld [smem:[#allocation0]]
  $region26: #{distmult_decode.1} parent=0
    _
  %s7 = ssub.s32 1, %s5
  %s8 = scalar_select 0, %s7, %s5
  // Predicated region
  $region2: #{distmult_decode.1} parent=0 // pred_check
    _
  $region3: #{distmult_decode.1} parent=0 // pred_check_branch
    %10 = sbr.rel (0) target = $region5
  $region4: #{distmult_decode.1} parent=0 // pred_region
    _
  $region5: #{distmult_decode.1} parent=0 // pred_fallthru
    _
  // Predicated region
  $region6: #{distmult_decode.1} parent=0 // pred_check
    _
  $region7: #{distmult_decode.1} parent=0 // pred_check_branch
    %12 = sbr.rel (0) target = $region9
  $region8: #{distmult_decode.1} parent=0 // pred_region
    _
  $region9: #{distmult_decode.1} parent=0 // pred_fallthru
    _
  // Predicated region
  $region10: #{distmult_decode.1} parent=0 // pred_check
    _
  $region11: #{distmult_decode.1} parent=0 // pred_check_branch
    %14 = sbr.rel (0) target = $region13
  $region12: #{distmult_decode.1} parent=0 // pred_region
    _
  $region13: #{distmult_decode.1} parent=0 // pred_fallthru
    _
  // Predicated region
  $region14: #{distmult_decode.1} parent=0 // pred_check
    _
  $region15: #{distmult_decode.1} parent=0 // pred_check_branch
    %16 = sbr.rel (0) target = $region17
  $region16: #{distmult_decode.1} parent=0 // pred_region
    _
  $region17: #{distmult_decode.1} parent=0 // pred_fallthru
    _
  %v17 = vld [vmem:[%s0] sm:$0xff]
  %v18 = vld [vmem:[%s0 + $0x8] sm:$0xff]
  %v19 = vld [vmem:[%s0 + $0x10] sm:$0xff]
  %v20 = vld [vmem:[%s0 + $0x18] sm:$0xff]
  %v21 = vld [vmem:[%s0 + $0x20] sm:$0xff]
  %v22 = vld [vmem:[%s0 + $0x28] sm:$0xff]
  %v23 = vld [vmem:[%s0 + $0x30] sm:$0xff]
  %v24 = vld [vmem:[%s0 + $0x38] sm:$0xff]
  %v25 = vld [vmem:[%s0 + $0x40] sm:$0xff]
  %v26 = vld [vmem:[%s0 + $0x48] sm:$0xff]
  %v27 = vld [vmem:[%s0 + $0x50] sm:$0xff]
  %v28 = vld [vmem:[%s0 + $0x58] sm:$0xff]
  %v29 = vld [vmem:[%s0 + $0x60] sm:$0xff]
  %v30 = vld [vmem:[%s0 + $0x68] sm:$0xff]
  %v31 = vld [vmem:[%s0 + $0x70] sm:$0xff]
  %v32 = vld [vmem:[%s0 + $0x78] sm:$0xff]
  %v33 = vld [vmem:[%s1] sm:$0xff]
  %v34 = vld [vmem:[%s1 + $0x8] sm:$0xff]
  %v35 = vld [vmem:[%s1 + $0x10] sm:$0xff]
  %v36 = vld [vmem:[%s1 + $0x18] sm:$0xff]
  %v37 = vld [vmem:[%s1 + $0x20] sm:$0xff]
  %v38 = vld [vmem:[%s1 + $0x28] sm:$0xff]
  %v39 = vld [vmem:[%s1 + $0x30] sm:$0xff]
  %v40 = vld [vmem:[%s1 + $0x38] sm:$0xff]
  %v41 = vld [vmem:[%s1 + $0x40] sm:$0xff]
  %v42 = vld [vmem:[%s1 + $0x48] sm:$0xff]
  %v43 = vld [vmem:[%s1 + $0x50] sm:$0xff]
  %v44 = vld [vmem:[%s1 + $0x58] sm:$0xff]
  %v45 = vld [vmem:[%s1 + $0x60] sm:$0xff]
  %v46 = vld [vmem:[%s1 + $0x68] sm:$0xff]
  %v47 = vld [vmem:[%s1 + $0x70] sm:$0xff]
  %v48 = vld [vmem:[%s1 + $0x78] sm:$0xff]
  %v49 = vmul.f32 %v17, %v33
  %v50 = vmul.f32 %v18, %v34
  %v51 = vmul.f32 %v19, %v35
  %v52 = vmul.f32 %v20, %v36
  %v53 = vmul.f32 %v21, %v37
  %v54 = vmul.f32 %v22, %v38
  %v55 = vmul.f32 %v23, %v39
  %v56 = vmul.f32 %v24, %v40
  %v57 = vmul.f32 %v25, %v41
  %v58 = vmul.f32 %v26, %v42
  %v59 = vmul.f32 %v27, %v43
  %v60 = vmul.f32 %v28, %v44
  %v61 = vmul.f32 %v29, %v45
  %v62 = vmul.f32 %v30, %v46
  %v63 = vmul.f32 %v31, %v47
  %v64 = vmul.f32 %v32, %v48
  %v65 = vld [vmem:[%s3] sm:$0xff]
  %vm66 = vcmask 261120
  %v68 = vsel %vm66, %v65, 0
  %v71 = vsel %vm66, %v49, 0
  %v74 = vsel %vm66, %v50, 0
  %v77 = vsel %vm66, %v51, 0
  %v80 = vsel %vm66, %v52, 0
  %v83 = vsel %vm66, %v53, 0
  %v86 = vsel %vm66, %v54, 0
  %v89 = vsel %vm66, %v55, 0
  %v92 = vsel %vm66, %v56, 0
  %v95 = vsel %vm66, %v57, 0
  %v98 = vsel %vm66, %v58, 0
  %v101 = vsel %vm66, %v59, 0
  %v104 = vsel %vm66, %v60, 0
  %v107 = vsel %vm66, %v61, 0
  %v110 = vsel %vm66, %v62, 0
  %v113 = vsel %vm66, %v63, 0
  %v116 = vsel %vm66, %v64, 0
  %118 = vmatpush.xpose.msra.mxu0 %v116
  %119 = vmatpush.xpose.msra.mxu0 %v113
  %120 = vmatpush.xpose.msra.mxu0 %v110
  %121 = vmatpush.xpose.msra.mxu0 %v107
  %122 = vmatpush.xpose.msra.mxu0 %v104
  %123 = vmatpush.xpose.msra.mxu0 %v101
  %124 = vmatpush.xpose.msra.mxu0 %v98
  %125 = vmatpush.xpose.msra.mxu0 %v95
  %126 = vmatpush.xpose.msra.mxu0 %v92
  %127 = vmatpush.xpose.msra.mxu0 %v89
  %128 = vmatpush.xpose.msra.mxu0 %v86
  %129 = vmatpush.xpose.msra.mxu0 %v83
  %130 = vmatpush.xpose.msra.mxu0 %v80
  %131 = vmatpush.xpose.msra.mxu0 %v77
  %132 = vmatpush.xpose.msra.mxu0 %v74
  %133 = vmatpush.xpose.msra.mxu0 %v71
  %134 = vmatmul.f32.gmra.mxu0 %v68
  %v135 = vpop.f32.mrf.mxu0
  %v136 = vadd.f32 0.0, %v135
  %137 = vdwg.mxu0
  %v138 = vld [vmem:[%s2] sm:$0x1]
  %v139 = vlaneseq
  %v140 = vshrl.u32 %v139, 7
  %v141 = vperm.slane %v138, 0
  %vm142 = vcmp.eq.s32.totalorder %v140, %v141
  %v143 = vsel %vm142, %v136, 0.0
  %v144 = vrot.slane %v143, 4
  %v145 = vadd.f32 %v143, %v144
  %v146 = vrot.slane %v145, 2
  %v147 = vadd.f32 %v145, %v146
  %v148 = vrot.slane %v147, 1
  %v149 = vadd.f32 %v147, %v148
  %150 = vst [vmem:[%s4] sm:$0x1] %v149
  // Predicated region
  $region18: #{distmult_decode.1} parent=0 // pred_check
    _
  $region19: #{distmult_decode.1} parent=0 // pred_check_branch
    %152 = sbr.rel (0) target = $region21
  $region20: #{distmult_decode.1} parent=0 // pred_region
    _
  $region21: #{distmult_decode.1} parent=0 // pred_fallthru
    _
  // Predicated region
  $region22: #{distmult_decode.1} parent=0 // pred_check
    _
  $region23: #{distmult_decode.1} parent=0 // pred_check_branch
    %154 = sbr.rel (0) target = $region25
  $region24: #{distmult_decode.1} parent=0 // pred_region
    _
  $region25: #{distmult_decode.1} parent=0 // pred_fallthru
    _

</llo_original>
